<compile_context>
chip_gen: v7x
topology: tpu7x:2x2x1
jax: 0.10.0
libtpu: 0.0.40
codegen_flags: <defaults>
</compile_context>

<pallas_src>
import functools
import math

import jax
import jax.numpy as jnp
from jax.experimental import pallas as pl
from jax.experimental.pallas import tpu as pltpu


def _round_up(x, m):
    return (x + m - 1) // m * m


def _mask_in_f32_default():
    """v5-class (and older) chips have no bf16 VPU -> keep the mask math in f32."""
    try:
        kind = jax.devices()[0].device_kind.lower()
    except Exception:
        return False
    return any(tag in kind for tag in ("v2", "v3", "v4", "v5"))


# --------------------------------------------------------------------------- #
# Kernel
# --------------------------------------------------------------------------- #
def _custom_linear_kernel(mask_in_f32, th_ref, x_ref, w_ref, b_ref, o_ref):
    """Grid step (i, j, k): o[i,j] (+)= x[i,k] @ sparsify(w[k,j]); o init = bias."""
    k = pl.program_id(2)

    # Output block index is K-invariant -> o_ref is VMEM-resident across K.
    @pl.when(k == 0)
    def _():
        o_ref[...] = jnp.broadcast_to(b_ref[...], o_ref.shape).astype(o_ref.dtype)

    th = th_ref[0]                        # scalar threshold (SMEM scalar prefetch)
    w = w_ref[...]                        # (tk, tn) weight tile, already (in,out) layout
    cmp_dtype = jnp.float32 if mask_in_f32 else w.dtype
    keep = jnp.abs(w.astype(cmp_dtype)) >= th.astype(cmp_dtype)
    w_sparse = jnp.where(keep, w, jnp.zeros_like(w))

    # Plain (tm,tk) @ (tk,tn) contraction — no transpose of the weight tile.
    o_ref[...] += jax.lax.dot_general(
        x_ref[...], w_sparse,
        dimension_numbers=(((1,), (0,)), ((), ())),
        preferred_element_type=jnp.float32,
    )


# --------------------------------------------------------------------------- #
# Cold path: per-weight-update preparation (threshold, cast, transpose, pad)
# --------------------------------------------------------------------------- #
def compute_weight_threshold(weight, sparsity):
    """matrix_drop_th threshold: the k-th largest |w|, k = ceil((1-sparsity)*numel).

    Cold path (once per weight update / period). For very large layers replace
    the full sort with jnp.quantile / top_k-on-subsample if recompute cost matters.
    """
    numel = weight.size
    keep = max(1, int(math.ceil((1.0 - sparsity) * numel)))
    abs_sorted = jnp.sort(jnp.abs(weight).reshape(-1))
    return abs_sorted[numel - keep]


def _weight_tiles(out_features, in_features, block_n, block_k):
    tn = min(block_n, _round_up(out_features, 128))
    tn = max(128, (tn // 128) * 128)
    tk = min(block_k, _round_up(in_features, 128))
    tk = max(128, (tk // 128) * 128)
    # Megacore: make sure the parallel N axis gets >= 2 programs when possible
    # (small-batch case often has grid_m == 1; this keeps both TCs busy on v7x).
    if _round_up(out_features, 128) // tn < 2 and tn >= 256:
        tn = max(128, (tn // 2 // 128) * 128)
    n_pad = _round_up(out_features, tn)
    k_pad = _round_up(in_features, tk)
    return tn, tk, n_pad, k_pad


def prepare_params(weight, bias=None, sparsity=0.5, *, use_bf16=True,
                   block_n=1024, block_k=2048, threshold=None):
    """One-time (per weight update) prep: threshold, transpose, cast, pad.

    weight: (out_features, in_features) f32; returns dict consumed by
    custom_linear_forward_prepared. Cache the result across forwards.
    """
    out_features, in_features = weight.shape
    tn, tk, n_pad, k_pad = _weight_tiles(out_features, in_features, block_n, block_k)

    if threshold is None:
        threshold = compute_weight_threshold(weight, sparsity)
    th_arr = jnp.asarray(threshold, jnp.float32).reshape((1,))

    op_dtype = jnp.bfloat16 if use_bf16 else jnp.float32
    # Transpose once to (in, out): kernel does a standard NN contraction.
    w_t = jnp.pad(weight.T.astype(op_dtype),
                  ((0, k_pad - in_features), (0, n_pad - out_features)))

    if bias is None:
        bias = jnp.zeros((out_features,), jnp.float32)
    b_row = jnp.pad(bias.astype(jnp.float32),
                    (0, n_pad - out_features)).reshape(1, n_pad)

    return {
        "w_t": w_t, "b": b_row, "th": th_arr,
        "out_features": out_features, "in_features": in_features,
        "tn": tn, "tk": tk,
    }


# --------------------------------------------------------------------------- #
# Hot path: per-forward jit
# --------------------------------------------------------------------------- #
@functools.partial(
    jax.jit,
    static_argnames=("out_features", "in_features", "tn", "tk", "block_m",
                     "mask_in_f32"),
)
def _forward_prepared(x, w_t, b_row, th_arr, *, out_features, in_features,
                      tn, tk, block_m=128, mask_in_f32=False):
    B = x.shape[0]
    k_pad, n_pad = w_t.shape
    op_dtype = w_t.dtype

    tm = min(block_m, _round_up(B, 8))
    m_pad = _round_up(B, tm)

    # Activations: cast to the operand dtype in the wrapper so the BlockSpec
    # DMA moves bf16, pad M to the sublane tile and K to the K tile.
    x_p = jnp.pad(x.astype(op_dtype),
                  ((0, m_pad - B), (0, k_pad - in_features)))

    grid = (m_pad // tm, n_pad // tn, k_pad // tk)

    # VMEM budget hint: double-buffered working set + headroom, capped at
    # 48 MiB (within v7x's 64 MiB physical; v5e/v6e have 128 MiB).
    itemsize = jnp.dtype(op_dtype).itemsize
    working_set = 2 * (tm * tk * itemsize + tk * tn * itemsize + tm * tn * 4) \
        + 2 * tn * 4
    vmem_limit = int(min(max(working_set + (8 << 20), 32 << 20), 48 << 20))

    out_p = pl.pallas_call(
        functools.partial(_custom_linear_kernel, mask_in_f32),
        out_shape=jax.ShapeDtypeStruct((m_pad, n_pad), jnp.float32),
        grid_spec=pltpu.PrefetchScalarGridSpec(
            num_scalar_prefetch=1,             # threshold -> SMEM scalar path
            grid=grid,
            in_specs=[
                # activation tile: (tm, tk)
                pl.BlockSpec((tm, tk), lambda i, j, k, th: (i, k)),
                # weight tile (pre-transposed to (in, out)): (tk, tn)
                pl.BlockSpec((tk, tn), lambda i, j, k, th: (k, j)),
                # bias row tile: (1, tn)
                pl.BlockSpec((1, tn), lambda i, j, k, th: (0, j)),
            ],
            out_specs=pl.BlockSpec((tm, tn), lambda i, j, k, th: (i, j)),
        ),
        compiler_params=pltpu.CompilerParams(
            dimension_semantics=("parallel", "parallel", "arbitrary"),
            vmem_limit_bytes=vmem_limit,
        ),
    )(th_arr, x_p, w_t, b_row)

    return out_p[:B, :out_features]


def custom_linear_forward_prepared(x, params, *, block_m=128, mask_in_f32=None):
    if mask_in_f32 is None:
        mask_in_f32 = _mask_in_f32_default()
    return _forward_prepared(
        x, params["w_t"], params["b"], params["th"],
        out_features=params["out_features"], in_features=params["in_features"],
        tn=params["tn"], tk=params["tk"], block_m=block_m,
        mask_in_f32=bool(mask_in_f32),
    )


def custom_linear_forward(x, weight, bias=None, *, sparsity=0.5, threshold=None,
                          use_bf16=True, block_m=128, block_n=1024, block_k=2048,
                          mask_in_f32=None):
    """One-shot convenience wrapper (prep + forward). In training, call
    prepare_params once per weight update and reuse the result instead."""
    params = prepare_params(weight, bias, sparsity, use_bf16=use_bf16,
                            block_n=block_n, block_k=block_k, threshold=threshold)
    return custom_linear_forward_prepared(x, params, block_m=block_m,
                                          mask_in_f32=mask_in_f32)


# --------------------------------------------------------------------------- #
# Reference + demo
# --------------------------------------------------------------------------- #
def _reference_forward(x, weight, bias, threshold, *, use_bf16, mask_in_f32):
    """Pure-JAX reference with the same dtype / masking semantics as the kernel."""
    th = jnp.asarray(threshold, jnp.float32).reshape(())
    if use_bf16:
        w = weight.astype(jnp.bfloat16)
        xx = x.astype(jnp.bfloat16)
    else:
        w = weight.astype(jnp.float32)
        xx = x.astype(jnp.float32)
    cmp_dtype = jnp.float32 if (mask_in_f32 or not use_bf16) else jnp.bfloat16
    keep = jnp.abs(w.astype(cmp_dtype)) >= th.astype(cmp_dtype)
    w_s = jnp.where(keep, w, jnp.zeros_like(w))
    out = jax.lax.dot_general(xx, w_s, (((1,), (1,)), ((), ())),
                              preferred_element_type=jnp.float32)
    return out + bias.astype(jnp.float32)


def init_params(key, in_features, out_features):
    """Deterministic init matching nn.Linear / CustomLinear.reset_parameters."""
    kw, kb = jax.random.split(key)
    a = math.sqrt(5.0)
    fan_in = in_features
    gain = math.sqrt(2.0 / (1.0 + a * a))
    w_bound = gain * math.sqrt(3.0 / fan_in)
    weight = jax.random.uniform(
        kw, (out_features, in_features), jnp.float32, -w_bound, w_bound)
    b_bound = 1.0 / math.sqrt(fan_in)
    bias = jax.random.uniform(kb, (out_features,), jnp.float32, -b_bound, b_bound)
    return weight, bias


if __name__ == "__main__":
    key = jax.random.PRNGKey(0)
    k_x, k_p = jax.random.split(key)

    # Small demo shapes: B=10 exercises M padding, out=300 exercises N padding,
    # small block_n/block_k exercise N tiling and the K-axis accumulation.
    B, in_features, out_features = 10, 384, 300
    sparsity = 0.5

    x = jax.random.normal(k_x, (B, in_features), jnp.float32)
    weight, bias = init_params(k_p, in_features, out_features)
    mask_in_f32 = _mask_in_f32_default()

    # --- bf16 default path (steady-state usage: prepare once, reuse) ---------
    params = prepare_params(weight, bias, sparsity, use_bf16=True,
                            block_n=128, block_k=128)
    out = custom_linear_forward_prepared(x, params, mask_in_f32=mask_in_f32)
    out = jax.block_until_ready(out)
    ref = _reference_forward(x, weight, bias, params["th"],
                             use_bf16=True, mask_in_f32=mask_in_f32)
    assert out.shape == (B, out_features)
    err = jnp.max(jnp.abs(out - ref))
    assert jnp.allclose(out, ref, atol=1e-2, rtol=1e-2), f"bf16 path mismatch {err}"

    # --- f32 path (matches the original module's dtype) ----------------------
    out32 = custom_linear_forward(x, weight, bias, sparsity=sparsity,
                                  use_bf16=False, block_n=256, block_k=256)
    out32 = jax.block_until_ready(out32)
    th32 = compute_weight_threshold(weight, sparsity)
    ref32 = _reference_forward(x, weight, bias, th32,
                               use_bf16=False, mask_in_f32=True)
    err32 = jnp.max(jnp.abs(out32 - ref32))
    assert jnp.allclose(out32, ref32, atol=1e-2, rtol=1e-2), f"f32 path mismatch {err32}"

    print("KERNEL_OK")
</pallas_src>

<mosaic_0001>
module attributes {stable_mosaic.version = 11 : i64} {
  func.func @_custom_linear_kernel(%arg0: i32, %arg1: i32, %arg2: i32, %arg3: memref<1xf32, #tpu.memory_space<smem>>, %arg4: memref<16x128xbf16, #tpu.memory_space<vmem>>, %arg5: memref<128x128xbf16, #tpu.memory_space<vmem>>, %arg6: memref<1x128xf32, #tpu.memory_space<vmem>>, %arg7: memref<16x128xf32, #tpu.memory_space<vmem>>) attributes {dimension_semantics = [#tpu.dimension_semantics<parallel>, #tpu.dimension_semantics<parallel>, #tpu.dimension_semantics<arbitrary>], iteration_bounds = array<i64: 1, 3, 3>, scalar_prefetch = 1 : i64, scratch_operands = 0 : i64, tpu.core_type = #tpu.core_type<tc>, window_params = [{transform_indices = @transform_0, window_bounds = array<i64: 16, 128>}, {transform_indices = @transform_1, window_bounds = array<i64: 128, 128>}, {transform_indices = @transform_2, window_bounds = array<i64: 1, 128>}, {transform_indices = @transform_3, window_bounds = array<i64: 16, 128>}]} {
    %c0_i32 = arith.constant 0 : i32
    %0 = arith.cmpi eq, %arg2, %c0_i32 : i32
    %1 = arith.extui %0 : i1 to i32
    %c0_i32_0 = arith.constant 0 : i32
    %2 = arith.cmpi ne, %1, %c0_i32_0 : i32
    scf.if %2 {
      %c0_10 = arith.constant 0 : index
      %c0_11 = arith.constant 0 : index
      %16 = vector.load %arg6[%c0_10, %c0_11] : memref<1x128xf32, #tpu.memory_space<vmem>>, vector<1x128xf32>
      %17 = vector.shape_cast %16 : vector<1x128xf32> to vector<1x128xf32>
      %18 = vector.broadcast %17 : vector<1x128xf32> to vector<16x128xf32>
      %c0_12 = arith.constant 0 : index
      %c0_13 = arith.constant 0 : index
      %19 = vector.load %arg7[%c0_12, %c0_13] : memref<16x128xf32, #tpu.memory_space<vmem>>, vector<16x128xf32>
      tpu.vector_store %arg7[%c0_12, %c0_13], %18 {strides = array<i32>} : memref<16x128xf32, #tpu.memory_space<vmem>>, vector<16x128xf32>,
    } else {
    }
    %c0 = arith.constant 0 : index
    %3 = memref.load %arg3[%c0] : memref<1xf32, #tpu.memory_space<smem>>
    %c0_1 = arith.constant 0 : index
    %c0_2 = arith.constant 0 : index
    %4 = vector.load %arg5[%c0_1, %c0_2] : memref<128x128xbf16, #tpu.memory_space<vmem>>, vector<128x128xbf16>
    %5 = math.absf %4 : vector<128x128xbf16>
    %6 = arith.truncf %3 : f32 to bf16
    %7 = vector.broadcast %6 : bf16 to vector<128x128xbf16>
    %8 = arith.cmpf oge, %5, %7 : vector<128x128xbf16>
    %cst = arith.constant 0.000000e+00 : bf16
    %9 = vector.broadcast %cst : bf16 to vector<128x128xbf16>
    %10 = arith.select %8, %4, %9 : vector<128x128xi1>, vector<128x128xbf16>
    %c0_3 = arith.constant 0 : index
    %c0_4 = arith.constant 0 : index
    %11 = vector.load %arg7[%c0_3, %c0_4] : memref<16x128xf32, #tpu.memory_space<vmem>>, vector<16x128xf32>
    %c0_5 = arith.constant 0 : index
    %c0_6 = arith.constant 0 : index
    %12 = vector.load %arg4[%c0_5, %c0_6] : memref<16x128xbf16, #tpu.memory_space<vmem>>, vector<16x128xbf16>
    %cst_7 = arith.constant dense<0.000000e+00> : vector<16x128xf32>
    %13 = tpu.matmul %12, %10, %cst_7 {dimension_numbers = #tpu.dot_dimension_numbers<[1], [0], [0], [1], [0, 0, 1, 1], [], []>} : vector<16x128xbf16>, vector<128x128xbf16>, vector<16x128xf32> -> vector<16x128xf32>
    %14 = arith.addf %11, %13 : vector<16x128xf32>
    %c0_8 = arith.constant 0 : index
    %c0_9 = arith.constant 0 : index
    %15 = vector.load %arg7[%c0_8, %c0_9] : memref<16x128xf32, #tpu.memory_space<vmem>>, vector<16x128xf32>
    tpu.vector_store %arg7[%c0_8, %c0_9], %14 {strides = array<i32>} : memref<16x128xf32, #tpu.memory_space<vmem>>, vector<16x128xf32>,
    return
  }
  func.func @transform_0(%arg0: i32, %arg1: i32, %arg2: i32, %arg3: memref<1xf32, #tpu.memory_space<smem>>) -> (i32, i32) {
    %c0_i32 = arith.constant 0 : i32
    return %arg0, %arg2 : i32, i32
  }
  func.func @transform_1(%arg0: i32, %arg1: i32, %arg2: i32, %arg3: memref<1xf32, #tpu.memory_space<smem>>) -> (i32, i32) {
    %c0_i32 = arith.constant 0 : i32
    return %arg2, %arg1 : i32, i32
  }
  func.func @transform_2(%arg0: i32, %arg1: i32, %arg2: i32, %arg3: memref<1xf32, #tpu.memory_space<smem>>) -> (i32, i32) {
    %c0_i32 = arith.constant 0 : i32
    %c0_i32_0 = arith.constant 0 : i32
    return %c0_i32, %arg1 : i32, i32
  }
  func.func @transform_3(%arg0: i32, %arg1: i32, %arg2: i32, %arg3: memref<1xf32, #tpu.memory_space<smem>>) -> (i32, i32) {
    %c0_i32 = arith.constant 0 : i32
    return %arg0, %arg1 : i32, i32
  }
}

</mosaic_0001>

<llo_original>
// kernel: _forward_prepared.1
$region0: #{_forward_prepared.1}
  #allocation0 [shape = 'u32[]', space=smem, size = 0x4, offset = 0x4, fixed_abs, tag = 'smem constant byte address 0x4 - core index']
  #allocation1 [shape = 'u32[144,128]{1,0:T(1,128)}', space=vmem, size = 0x12000, scoped, tag = 'internal scratch']
  #allocation2 [shape = 's32[1]{0}', space=sflag, size = 0x4, scoped, tag = 'scoped memory for _forward_prepared.1']
  #allocation3 [shape = 'f32[1]{0:T(128)S(6)}', space=smem, size = 0x200, scoped, tag = 'prefetched SMEM operand 0']
  %s0 = inlined_call_operand.<no memory space> [shape: f32[1], index: 0, kind: input, shape index: {}]
  %s1 = inlined_call_operand.vmem [shape: bf16[16,384], index: 1, kind: input, shape index: {}]
  %s2 = inlined_call_operand.hbm [shape: bf16[384,384], index: 2, kind: input, shape index: {}]
  %s3 = inlined_call_operand.vmem [shape: f32[1,384], index: 3, kind: input, shape index: {}]
  %s4 = inlined_call_operand.hbm [shape: f32[16,384], index: 4, kind: output, shape index: {}]
  %s5 = sld [smem:[#allocation0]]
  $region94: #{_forward_prepared.1} parent=0
    _
  %s7 = ssub.s32 1, %s5
  %s8 = scalar_select 0, %s7, %s5
  %9 = sst [smem:[#allocation3]] %s0
  $region1: #{_forward_prepared.1} parent=0
    #allocation4 [shape = 'u8[8192]{0}', space=vmem, size = 0x2000, scoped, tag = 'input window, operand 1']
    #allocation5 [shape = 'u8[65536]{0}', space=vmem, size = 0x10000, scoped, tag = 'input window, operand 2']
    #allocation6 [shape = 's32[2]{0}', space=sflag, size = 0x8, scoped, tag = 'scoped memory for _forward_prepared.1']
    #allocation7 [shape = 's32[2]{0}', space=sflag, size = 0x8, scoped, tag = 'scoped memory for _forward_prepared.1']
    #allocation8 [shape = 'u8[16384]{0}', space=vmem, size = 0x4000, scoped, tag = 'output window, operand 0']
    %10 = vsyncpa [#allocation6], 0
    %s11 = scalar_lea.sflag [#allocation6], 1
    %12 = vsyncpa %s11, 0
    %13 = vsyncpa [#allocation7], 0
    %s14 = scalar_lea.sflag [#allocation7], 1
    %15 = vsyncpa %s14, 0
    loop: start=0, step=1, limit=11
    $region2: #{_forward_prepared.1} parent=1 // loop_pre_header
      _
    $region3: #{_forward_prepared.1} parent=1 // loop_header
      %s17 = sphi 0, %s21
      %p18 = scmp.ge.s32.totalorder %s17, 11
      %s24 = sphi 0, %s43
      %s25 = sphi 0, %s39
      %s26 = sphi 0, %s35
      %s27 = sphi 0, %s24
      %s28 = sphi 0, %s25
      %s29 = sphi 0, %s26
      %s30 = sphi 0, %s27
      %s31 = sphi 0, %s28
      %s32 = sphi 0, %s29
      %s48 = sphi 0, %s50
      %s51 = sphi 0, %s48
      %s52 = sphi 0, %s51
      %s68 = sphi 0, %s52
      %s76 = sphi 0, %s78
      %s79 = sphi 0, %s76
      %s80 = sphi 0, %s79
      %s96 = sphi 0, %s80
      %s102 = sphi 0, %s104
      %s105 = sphi 0, %s102
      %s106 = sphi 0, %s105
      %s122 = sphi 0, %s106
      %s130 = sphi 0, %s132
      %s133 = sphi 0, %s130
      %s134 = sphi 0, %s133
      %s150 = sphi 0, %s134
    $region4: #{_forward_prepared.1} parent=1 // loop_header_branch
      %20 = sbr.rel (%p18) target = $region8
    $region5: #{_forward_prepared.1} parent=1 // loop_body
      %s22 = ssub.s32 %s17, 1
      %s23 = ssub.s32 %s17, 2
      %s33 = sadd.s32 1, %s26
      %p34 = scmp.ge.s32.totalorder %s33, 3
      %s35 = scalar_select %p34, 0, %s33
      %s36 = sadd.s32 1, %s25
      %s37 = scalar_select %p34, %s36, %s25
      %p38 = scmp.ge.s32.totalorder %s37, 3
      %s39 = scalar_select %p38, 0, %s37
      %s40 = sadd.s32 1, %s24
      %s41 = scalar_select %p38, %s40, %s24
      %p42 = scmp.ge.s32.totalorder %s41, 1
      %s43 = scalar_select %p42, 0, %s41
      %s44 = ssub.s32 %s24, %s43
      %s45 = ssub.s32 %s26, %s35
      %s46 = sor.u32 %s44, %s45
      %p47 = scmp.eq.s32.totalorder %s46, 0
      %s49 = sadd.s32 %s48, 1
      %s50 = scalar_select %p47, %s48, %s49
      %p53 = pneg %p47
      %p54 = scmp.eq.s32.totalorder %s17, 8
      %p55 = por %p53, %p54
      %p56 = scmp.ne.s32.totalorder %s48, %s51
      %p57 = scmp.eq.s32.totalorder %s17, 0
      %p58 = por %p56, %p57
      %p59 = scmp.ne.s32.totalorder %s48, %s51
      %p60 = scmp.eq.s32.totalorder %s22, 8
      %p61 = por %p59, %p60
      %p62 = scmp.ne.s32.totalorder %s51, %s52
      %p63 = scmp.eq.s32.totalorder %s22, 0
      %p64 = por %p62, %p63
      %p65 = scmp.ne.s32.totalorder %s51, %s52
      %p66 = scmp.eq.s32.totalorder %s23, 8
      %p67 = por %p65, %p66
      %p69 = scmp.ne.s32.totalorder %s52, %s68
      %p70 = scmp.eq.s32.totalorder %s23, 0
      %p71 = por %p69, %p70
      %s72 = ssub.s32 %s26, %s35
      %s73 = ssub.s32 %s25, %s39
      %s74 = sor.u32 %s72, %s73
      %p75 = scmp.eq.s32.totalorder %s74, 0
      %s77 = sadd.s32 %s76, 1
      %s78 = scalar_select %p75, %s76, %s77
      %p81 = pneg %p75
      %p82 = scmp.eq.s32.totalorder %s17, 8
      %p83 = por %p81, %p82
      %p84 = scmp.ne.s32.totalorder %s76, %s79
      %p85 = scmp.eq.s32.totalorder %s17, 0
      %p86 = por %p84, %p85
      %p87 = scmp.ne.s32.totalorder %s76, %s79
      %p88 = scmp.eq.s32.totalorder %s22, 8
      %p89 = por %p87, %p88
      %p90 = scmp.ne.s32.totalorder %s79, %s80
      %p91 = scmp.eq.s32.totalorder %s22, 0
      %p92 = por %p90, %p91
      %p93 = scmp.ne.s32.totalorder %s79, %s80
      %p94 = scmp.eq.s32.totalorder %s23, 8
      %p95 = por %p93, %p94
      %p97 = scmp.ne.s32.totalorder %s80, %s96
      %p98 = scmp.eq.s32.totalorder %s23, 0
      %p99 = por %p97, %p98
      %s100 = ssub.s32 %s25, %s39
      %p101 = scmp.eq.s32.totalorder %s100, 0
      %s103 = sadd.s32 %s102, 1
      %s104 = scalar_select %p101, %s102, %s103
      %p107 = pneg %p101
      %p108 = scmp.eq.s32.totalorder %s17, 8
      %p109 = por %p107, %p108
      %p110 = scmp.ne.s32.totalorder %s102, %s105
      %p111 = scmp.eq.s32.totalorder %s17, 0
      %p112 = por %p110, %p111
      %p113 = scmp.ne.s32.totalorder %s102, %s105
      %p114 = scmp.eq.s32.totalorder %s22, 8
      %p115 = por %p113, %p114
      %p116 = scmp.ne.s32.totalorder %s105, %s106
      %p117 = scmp.eq.s32.totalorder %s22, 0
      %p118 = por %p116, %p117
      %p119 = scmp.ne.s32.totalorder %s105, %s106
      %p120 = scmp.eq.s32.totalorder %s23, 8
      %p121 = por %p119, %p120
      %p123 = scmp.ne.s32.totalorder %s106, %s122
      %p124 = scmp.eq.s32.totalorder %s23, 0
      %p125 = por %p123, %p124
      %s126 = ssub.s32 %s24, %s43
      %s127 = ssub.s32 %s25, %s39
      %s128 = sor.u32 %s126, %s127
      %p129 = scmp.eq.s32.totalorder %s128, 0
      %s131 = sadd.s32 %s130, 1
      %s132 = scalar_select %p129, %s130, %s131
      %p135 = pneg %p129
      %p136 = scmp.eq.s32.totalorder %s17, 8
      %p137 = por %p135, %p136
      %p138 = scmp.ne.s32.totalorder %s130, %s133
      %p139 = scmp.eq.s32.totalorder %s17, 0
      %p140 = por %p138, %p139
      %p141 = scmp.ne.s32.totalorder %s130, %s133
      %p142 = scmp.eq.s32.totalorder %s22, 8
      %p143 = por %p141, %p142
      %p144 = scmp.ne.s32.totalorder %s133, %s134
      %p145 = scmp.eq.s32.totalorder %s22, 0
      %p146 = por %p144, %p145
      %p147 = scmp.ne.s32.totalorder %s133, %s134
      %p148 = scmp.eq.s32.totalorder %s23, 8
      %p149 = por %p147, %p148
      %p151 = scmp.ne.s32.totalorder %s134, %s150
      %p152 = scmp.eq.s32.totalorder %s23, 0
      %p153 = por %p151, %p152
      %p154 = scmp.le.s32.totalorder 1, %s17
      %p155 = scmp.lt.s32.totalorder %s17, 10
      %p156 = pnand %p154, %p155
      %p157 = pneg %p156
      // Predicated region
      $region9: #{_forward_prepared.1} parent=5 // pred_check
        _
      $region10: #{_forward_prepared.1} parent=5 // pred_check_branch
        %159 = sbr.rel (%p156) target = $region12
      $region11: #{_forward_prepared.1} parent=5 // pred_region
        %s160 = ssub.s32 %s17, 1
      $region12: #{_forward_prepared.1} parent=5 // pred_fallthru
        _
      %p161 = scmp.lt.s32.totalorder %s17, 9
      // Predicated region
      $region13: #{_forward_prepared.1} parent=5 // pred_check
        %p162 = pneg %p161
      $region14: #{_forward_prepared.1} parent=5 // pred_check_branch
        %164 = sbr.rel (%p162) target = $region16
      $region15: #{_forward_prepared.1} parent=5 // pred_region
        // Predicated region
        $region17: #{_forward_prepared.1} parent=15 // pred_check
          %p165 = pneg %p58
        $region18: #{_forward_prepared.1} parent=15 // pred_check_branch
          %167 = sbr.rel (%p165) target = $region20
        $region19: #{_forward_prepared.1} parent=15 // pred_region
          %s168 = sand.u32 %s48, 1
          %s169 = sand.u32 %s48, 1
          %s170 = smul.addr %s169, 8
          %s171 = scalar_lea.vmem [#allocation4], %s170
          %s172 = smul.u32 2, %s24
          %s173 = smul.addr %s172, 3
          %s174 = sadd.s32 %s26, %s173
          %s175 = smul.addr %s174, 4
          %s176 = scalar_lea.vmem %s1, %s175
          // Predicated region
          $region21: #{_forward_prepared.1} parent=19 // pred_check
            _
          $region22: #{_forward_prepared.1} parent=19 // pred_check_branch
            %178 = sbr.rel (0) target = $region24
          $region23: #{_forward_prepared.1} parent=19 // pred_region
            // Predicated region
            $region25: #{_forward_prepared.1} parent=23 // pred_check
              _
            $region26: #{_forward_prepared.1} parent=23 // pred_check_branch
              %180 = sbr.rel target = $region28
            $region27: #{_forward_prepared.1} parent=23 // pred_region
              // Predicated region
              $region40: #{_forward_prepared.1} parent=27 // pred_check
                _
              $region41: #{_forward_prepared.1} parent=27 // pred_check_branch
                %197 = sbr.rel (0) target = $region43
              $region42: #{_forward_prepared.1} parent=27 // pred_region
                loop: start=0, step=1, limit=1
                $region44: #{_forward_prepared.1} parent=42 // loop_pre_header
                  _
                $region45: #{_forward_prepared.1} parent=42 // loop_header
                  %s199 = sphi 0, %s203
                  %p200 = scmp.ge.s32.totalorder %s199, 1
                  %s204 = sphi %s176, %s176
                  %s205 = sphi %s171, %s171
                $region46: #{_forward_prepared.1} parent=42 // loop_header_branch
                  %202 = sbr.rel (%p200) target = $region50
                $region47: #{_forward_prepared.1} parent=42 // loop_body
                  _
                $region48: #{_forward_prepared.1} parent=42 // loop_footer
                  %s203 = sadd.s32 1, %s199
                $region49: #{_forward_prepared.1} parent=42 // loop_footer_branch
                  %198 = sbr.rel target = $region45
                $region50: #{_forward_prepared.1} parent=42 // loop_exit
                  _
                loop: start=0, step=1, limit=1
                $region51: #{_forward_prepared.1} parent=42 // loop_pre_header
                  _
                $region52: #{_forward_prepared.1} parent=42 // loop_header
                  %s208 = sphi 0, %s212
                  %p209 = scmp.ge.s32.totalorder %s208, 1
                  %s213 = sphi %s176, %s176
                  %s214 = sphi %s171, %s171
                $region53: #{_forward_prepared.1} parent=42 // loop_header_branch
                  %211 = sbr.rel (%p209) target = $region57
                $region54: #{_forward_prepared.1} parent=42 // loop_body
                  %v215 = vld [vmem:[%s213] sm:$0xf]
                  %216 = vst [vmem:[%s214] sm:$0xf] %v215
                  %v217 = vld [vmem:[%s213 + $0xc] sm:$0xf]
                  %218 = vst [vmem:[%s214 + $0x4] sm:$0xf] %v217
                $region55: #{_forward_prepared.1} parent=42 // loop_footer
                  %s212 = sadd.s32 1, %s208
                $region56: #{_forward_prepared.1} parent=42 // loop_footer_branch
                  %207 = sbr.rel target = $region52
                $region57: #{_forward_prepared.1} parent=42 // loop_exit
                  _
              $region43: #{_forward_prepared.1} parent=27 // pred_fallthru
                _
            $region28: #{_forward_prepared.1} parent=23 // pred_fallthru
              _
            // Predicated region
            $region29: #{_forward_prepared.1} parent=23 // pred_check
              _
            $region30: #{_forward_prepared.1} parent=23 // pred_check_branch
              %182 = sbr.rel (0) target = $region32
            $region31: #{_forward_prepared.1} parent=23 // pred_region
              loop: start=0, step=1, limit=1
              $region33: #{_forward_prepared.1} parent=31 // loop_pre_header
                _
              $region34: #{_forward_prepared.1} parent=31 // loop_header
                %s185 = sphi 0, %s189
                %p186 = scmp.ge.s32.totalorder %s185, 1
                %s190 = sphi %s176, %s176
                %s191 = sphi %s171, %s171
              $region35: #{_forward_prepared.1} parent=31 // loop_header_branch
                %188 = sbr.rel (%p186) target = $region39
              $region36: #{_forward_prepared.1} parent=31 // loop_body
                %v192 = vld [vmem:[%s190] sm:$0xf]
                %193 = vst [vmem:[%s191] sm:$0xf] %v192
                %v194 = vld [vmem:[%s190 + $0xc] sm:$0xf]
                %195 = vst [vmem:[%s191 + $0x4] sm:$0xf] %v194
              $region37: #{_forward_prepared.1} parent=31 // loop_footer
                %s189 = sadd.s32 1, %s185
              $region38: #{_forward_prepared.1} parent=31 // loop_footer_branch
                %184 = sbr.rel target = $region34
              $region39: #{_forward_prepared.1} parent=31 // loop_exit
                _
            $region32: #{_forward_prepared.1} parent=23 // pred_fallthru
              _
          $region24: #{_forward_prepared.1} parent=19 // pred_fallthru
            _
          %219 = vnop
        $region20: #{_forward_prepared.1} parent=15 // pred_fallthru
          _
        // Predicated region
        $region58: #{_forward_prepared.1} parent=15 // pred_check
          %p220 = pneg %p86
        $region59: #{_forward_prepared.1} parent=15 // pred_check_branch
          %222 = sbr.rel (%p220) target = $region61
        $region60: #{_forward_prepared.1} parent=15 // pred_region
          %s223 = sand.u32 %s76, 1
          %s224 = scalar_lea.sflag [#allocation6], %s223
          %s225 = sand.u32 %s76, 1
          %s226 = smul.addr %s225, 64
          %s227 = scalar_lea.vmem [#allocation5], %s226
          %s228 = smul.u32 16, %s26
          %s230 = ssub.s32 1024, 1024
          %231 = vsyncadd %s224, %s230
          %s232 = smul.addr %s228, 3
          %s233 = sadd.s32 %s25, %s232
          %s234 = smul.addr %s233, 64
          %s235 = scalar_lea.hbm %s2, %s234
          %s236 = sshll.u32 %s227, 4
          %s237 = int_to_ptr.vmem [resolvable:$true] %s236
          %242 = dma.hbm_to_vmem [thread:$0]  %s235, 1024, %s237, %s224, 192, 64, 4
        $region61: #{_forward_prepared.1} parent=15 // pred_fallthru
          _
        // Predicated region
        $region62: #{_forward_prepared.1} parent=15 // pred_check
          %p243 = pneg %p112
        $region63: #{_forward_prepared.1} parent=15 // pred_check_branch
          %245 = sbr.rel (%p243) target = $region65
        $region64: #{_forward_prepared.1} parent=15 // pred_region
          %p246 = scmp.lt.s32.totalorder %s25, 2
          %s247 = scalar_select %p246, %s25, 2
          %s248 = scalar_lea.vmem %s3, %s247
        $region65: #{_forward_prepared.1} parent=15 // pred_fallthru
          _
      $region16: #{_forward_prepared.1} parent=5 // pred_fallthru
        _
      %p249 = scmp.le.s32.totalorder 1, %s17
      %p250 = scmp.lt.s32.totalorder %s17, 10
      %p251 = pnand %p249, %p250
      %p252 = pneg %p251
      // Predicated region
      $region66: #{_forward_prepared.1} parent=5 // pred_check
        _
      $region67: #{_forward_prepared.1} parent=5 // pred_check_branch
        %254 = sbr.rel (%p251) target = $region69
      $region68: #{_forward_prepared.1} parent=5 // pred_region
        %s255 = ssub.s32 %s17, 1
        %s256 = sand.u32 %s51, 1
        %s257 = sand.u32 %s51, 1
        %s258 = smul.addr %s257, 8
        %s259 = scalar_lea.vmem [#allocation4], %s258
        // Predicated region
        $region70: #{_forward_prepared.1} parent=68 // pred_check
          %p260 = pneg %p64
        $region71: #{_forward_prepared.1} parent=68 // pred_check_branch
          %262 = sbr.rel (%p260) target = $region73
        $region72: #{_forward_prepared.1} parent=68 // pred_region
          _
        $region73: #{_forward_prepared.1} parent=68 // pred_fallthru
          _
        %s263 = sand.u32 %s79, 1
        %s264 = scalar_lea.sflag [#allocation6], %s263
        %s265 = sand.u32 %s79, 1
        %s266 = smul.addr %s265, 64
        %s267 = scalar_lea.vmem [#allocation5], %s266
        // Predicated region
        $region74: #{_forward_prepared.1} parent=68 // pred_check
          %p268 = pneg %p92
        $region75: #{_forward_prepared.1} parent=68 // pred_check_branch
          %270 = sbr.rel (%p268) target = $region77
        $region76: #{_forward_prepared.1} parent=68 // pred_region
          %271 = dma.done %s264, 1024
        $region77: #{_forward_prepared.1} parent=68 // pred_fallthru
          _
        %s272 = sand.u32 %s51, 1
        %s273 = sand.u32 %s51, 1
        %s274 = smul.addr %s273, 8
        %s275 = scalar_lea.vmem [#allocation4], %s274
        %p276 = pneg %p64
        %p277 = pneg %p61
        %s278 = sand.u32 %s79, 1
        %s279 = scalar_lea.sflag [#allocation6], %s278
        %s280 = sand.u32 %s79, 1
        %s281 = smul.addr %s280, 64
        %s282 = scalar_lea.vmem [#allocation5], %s281
        %p283 = pneg %p92
        %p284 = pneg %p89
        %p285 = scmp.lt.s32.totalorder %s28, 2
        %s286 = scalar_select %p285, %s28, 2
        %s287 = scalar_lea.vmem %s3, %s286
        %p288 = pneg %p118
        %p289 = pneg %p115
        %p290 = pneg %p146
        %p291 = pneg %p143
        %s292 = sand.u32 %s133, 1
        %s293 = scalar_lea.sflag [#allocation7], %s292
        %s294 = sand.u32 %s133, 1
        %s295 = smul.addr %s294, 16
        %s296 = scalar_lea.vmem [#allocation8], %s295
        %s297 = smul.u32 2, %s27
        %s298 = smul.u32 16, %s29
        %p299 = scmp.lt.s32.totalorder %s28, 2
        %s300 = scalar_select %p299, %s28, 2
        %s301 = scalar_lea.vmem %s3, %s300
        %s302 = smul.u32 2, %s27
        %p304 = scmp.eq.s32.totalorder %s29, 0
        // Predicated region
        $region78: #{_forward_prepared.1} parent=68 // pred_check
          %p305 = pneg %p304
        $region79: #{_forward_prepared.1} parent=68 // pred_check_branch
          %307 = sbr.rel (%p305) target = $region81
        $region80: #{_forward_prepared.1} parent=68 // pred_region
          %v308 = vld [vmem:[%s301] sm:$0x1]
          %v310 = vlaneseq
          %v311 = vshrl.u32 %v310, 7
          %v312 = vsub.s32 0, %v311
          %v313 = vrot.slane %v308, %v312
          %315 = vst [vmem:[%s296] sm:$0xff] %v313
          %316 = vst [vmem:[%s296 + $0x8] sm:$0xff] %v313
        $region81: #{_forward_prepared.1} parent=68 // pred_fallthru
          _
        %s317 = sld [smem:[#allocation3]]
        %v318 = vld [vmem:[%s267] sm:$0xf]
        %v319 = vld [vmem:[%s267 + $0x4] sm:$0xf]
        %v320 = vld [vmem:[%s267 + $0x8] sm:$0xf]
        %v321 = vld [vmem:[%s267 + $0xc] sm:$0xf]
        %v322 = vld [vmem:[%s267 + $0x10] sm:$0xf]
        %v323 = vld [vmem:[%s267 + $0x14] sm:$0xf]
        %v324 = vld [vmem:[%s267 + $0x18] sm:$0xf]
        %v325 = vld [vmem:[%s267 + $0x1c] sm:$0xf]
        %v326 = vld [vmem:[%s267 + $0x20] sm:$0xf]
        %v327 = vld [vmem:[%s267 + $0x24] sm:$0xf]
        %v328 = vld [vmem:[%s267 + $0x28] sm:$0xf]
        %v329 = vld [vmem:[%s267 + $0x2c] sm:$0xf]
        %v330 = vld [vmem:[%s267 + $0x30] sm:$0xf]
        %v331 = vld [vmem:[%s267 + $0x34] sm:$0xf]
        %v332 = vld [vmem:[%s267 + $0x38] sm:$0xf]
        %v333 = vld [vmem:[%s267 + $0x3c] sm:$0xf]
        %v334 = vand.u32 2147450879, %v318
        %v335 = vand.u32 2147450879, %v319
        %v336 = vand.u32 2147450879, %v320
        %v337 = vand.u32 2147450879, %v321
        %v338 = vand.u32 2147450879, %v322
        %v339 = vand.u32 2147450879, %v323
        %v340 = vand.u32 2147450879, %v324
        %v341 = vand.u32 2147450879, %v325
        %v342 = vand.u32 2147450879, %v326
        %v343 = vand.u32 2147450879, %v327
        %v344 = vand.u32 2147450879, %v328
        %v345 = vand.u32 2147450879, %v329
        %v346 = vand.u32 2147450879, %v330
        %v347 = vand.u32 2147450879, %v331
        %v348 = vand.u32 2147450879, %v332
        %v349 = vand.u32 2147450879, %v333
        %p351 = scmp.ne.f32.partialorder %s317, %s317
        %s352 = sshrl.u32 %s317, 16
        %s353 = sand.u32 %s352, 1
        %s354 = sadd.s32 32767, %s353
        %s355 = sadd.s32 %s317, %s354
        %s356 = sand.u32 %s355, 4294901760
        %s357 = scalar_select %p351, 2143289344, %s356
        %s359 = sshrl.u32 %s357, 16
        %s360 = sshll.u32 %s359, 16
        %s361 = sor.u32 %s359, %s360
        %v362 = vstv %s361
        %vm364 = vcmp.ge.bf16.partialorder %v334, %v362
        %vm365 = vcmp.ge.bf16.partialorder %v335, %v362
        %vm366 = vcmp.ge.bf16.partialorder %v336, %v362
        %vm367 = vcmp.ge.bf16.partialorder %v337, %v362
        %vm368 = vcmp.ge.bf16.partialorder %v338, %v362
        %vm369 = vcmp.ge.bf16.partialorder %v339, %v362
        %vm370 = vcmp.ge.bf16.partialorder %v340, %v362
        %vm371 = vcmp.ge.bf16.partialorder %v341, %v362
        %vm372 = vcmp.ge.bf16.partialorder %v342, %v362
        %vm373 = vcmp.ge.bf16.partialorder %v343, %v362
        %vm374 = vcmp.ge.bf16.partialorder %v344, %v362
        %vm375 = vcmp.ge.bf16.partialorder %v345, %v362
        %vm376 = vcmp.ge.bf16.partialorder %v346, %v362
        %vm377 = vcmp.ge.bf16.partialorder %v347, %v362
        %vm378 = vcmp.ge.bf16.partialorder %v348, %v362
        %vm379 = vcmp.ge.bf16.partialorder %v349, %v362
        %v380 = vsel %vm364, %v318, 0
        %v381 = vsel %vm365, %v319, 0
        %v382 = vsel %vm366, %v320, 0
        %v383 = vsel %vm367, %v321, 0
        %v384 = vsel %vm368, %v322, 0
        %v385 = vsel %vm369, %v323, 0
        %v386 = vsel %vm370, %v324, 0
        %v387 = vsel %vm371, %v325, 0
        %v388 = vsel %vm372, %v326, 0
        %v389 = vsel %vm373, %v327, 0
        %v390 = vsel %vm374, %v328, 0
        %v391 = vsel %vm375, %v329, 0
        %v392 = vsel %vm376, %v330, 0
        %v393 = vsel %vm377, %v331, 0
        %v394 = vsel %vm378, %v332, 0
        %v395 = vsel %vm379, %v333, 0
        %v396 = vld [vmem:[%s296] sm:$0xff]
        %v397 = vld [vmem:[%s296 + $0x8] sm:$0xff]
        %v398 = vld [vmem:[%s259] sm:$0xf]
        %v399 = vld [vmem:[%s259 + $0x4] sm:$0xf]
        %v402 = vunpack.c.l.b16 %v398
        %v403 = vunpack.c.l.b16 %v399
        %v404 = vpack.c.b16 %v403, %v402
        %v422 = vunpack.c.l.b16 %v380
        %v423 = vunpack.c.l.b16 %v381
        %v424 = vunpack.c.l.b16 %v382
        %v425 = vunpack.c.l.b16 %v383
        %v426 = vunpack.c.l.b16 %v384
        %v427 = vunpack.c.l.b16 %v385
        %v428 = vunpack.c.l.b16 %v386
        %v429 = vunpack.c.l.b16 %v387
        %v430 = vunpack.c.l.b16 %v388
        %v431 = vunpack.c.l.b16 %v389
        %v432 = vunpack.c.l.b16 %v390
        %v433 = vunpack.c.l.b16 %v391
        %v434 = vunpack.c.l.b16 %v392
        %v435 = vunpack.c.l.b16 %v393
        %v436 = vunpack.c.l.b16 %v394
        %v437 = vunpack.c.l.b16 %v395
        %v438 = vpack.c.b16 %v423, %v422
        %v439 = vpack.c.b16 %v425, %v424
        %v440 = vpack.c.b16 %v427, %v426
        %v441 = vpack.c.b16 %v429, %v428
        %v442 = vpack.c.b16 %v431, %v430
        %v443 = vpack.c.b16 %v433, %v432
        %v444 = vpack.c.b16 %v435, %v434
        %v445 = vpack.c.b16 %v437, %v436
        %454 = vmatprep.subr.bf16.mxu0 0
        %455 = vmatpush1.bf16.msra.mxu0 %v438
        %456 = vmatprep.subr.bf16.mxu0 0
        %457 = vmatpush1.bf16.msra.mxu0 %v439
        %458 = vmatprep.subr.bf16.mxu0 0
        %459 = vmatpush1.bf16.msra.mxu0 %v440
        %460 = vmatprep.subr.bf16.mxu0 0
        %461 = vmatpush1.bf16.msra.mxu0 %v441
        %462 = vmatprep.subr.bf16.mxu0 0
        %463 = vmatpush1.bf16.msra.mxu0 %v442
        %464 = vmatprep.subr.bf16.mxu0 0
        %465 = vmatpush1.bf16.msra.mxu0 %v443
        %466 = vmatprep.subr.bf16.mxu0 0
        %467 = vmatpush1.bf16.msra.mxu0 %v444
        %468 = vmatprep.subr.bf16.mxu0 0
        %469 = vmatpush1.bf16.msra.mxu0 %v445
        %470 = vmatprep.subr.bf16.mxu0 0
        %471 = vmatpush1.bf16.msra.mxu0 0
        %472 = vmatprep.subr.bf16.mxu0 0
        %473 = vmatpush1.bf16.msra.mxu0 0
        %474 = vmatprep.subr.bf16.mxu0 0
        %475 = vmatpush1.bf16.msra.mxu0 0
        %476 = vmatprep.subr.bf16.mxu0 0
        %477 = vmatpush1.bf16.msra.mxu0 0
        %478 = vmatprep.subr.bf16.mxu0 0
        %479 = vmatpush1.bf16.msra.mxu0 0
        %480 = vmatprep.subr.bf16.mxu0 0
        %481 = vmatpush1.bf16.msra.mxu0 0
        %482 = vmatprep.subr.bf16.mxu0 0
        %483 = vmatpush1.bf16.msra.mxu0 0
        %484 = vmatprep.subr.bf16.mxu0 0
        %485 = vmatpush1.bf16.msra.mxu0 0
        %486 = vmatprep.mubr.bf16.mxu0 0
        %487 = vmatmul.mubr.bf16.gmra.mrb[0].mxu0 %v404
        %v488 = vpop.f32.mrb[0].mxu0
        %v489 = vadd.f32 0.0, %v488
        %v490 = vpop.f32.mrb[0].mxu0
        %v491 = vpop.f32.mrb[0].mxu0
        %v492 = vadd.f32 0.0, %v491
        %v493 = vpop.f32.mrb[0].mxu0
        %494 = vdwg.mxu0
        %v495 = vadd.f32 %v396, %v489
        %v496 = vadd.f32 %v397, %v492
        %497 = vst [vmem:[%s296] sm:$0xff] %v495
        %498 = vst [vmem:[%s296 + $0x8] sm:$0xff] %v496
        %s499 = sand.u32 %s133, 1
        %s500 = scalar_lea.sflag [#allocation7], %s499
        %s501 = sand.u32 %s133, 1
        %s502 = smul.addr %s501, 16
        %s503 = scalar_lea.vmem [#allocation8], %s502
        // Predicated region
        $region82: #{_forward_prepared.1} parent=68 // pred_check
          %p504 = pneg %p143
        $region83: #{_forward_prepared.1} parent=68 // pred_check_branch
          %506 = sbr.rel (%p504) target = $region85
        $region84: #{_forward_prepared.1} parent=68 // pred_region
          %s507 = smul.u32 2, %s27
          %s509 = ssub.s32 256, 256
          %510 = vsyncadd %s500, %s509
          %s511 = smul.addr %s507, 3
          %s512 = sadd.s32 %s28, %s511
          %s513 = smul.addr %s512, 128
          %s514 = scalar_lea.hbm %s4, %s513
          %s515 = sshll.u32 %s503, 4
          %s516 = int_to_ptr.vmem [resolvable:$true] %s515
          %521 = dma.vmem_to_hbm [thread:$0]  %s516, 256, %s514, %s500, 128, 384, 8
        $region85: #{_forward_prepared.1} parent=68 // pred_fallthru
          _
      $region69: #{_forward_prepared.1} parent=5 // pred_fallthru
        _
      %p522 = scmp.le.s32.totalorder 2, %s17
      // Predicated region
      $region86: #{_forward_prepared.1} parent=5 // pred_check
        %p523 = pneg %p522
      $region87: #{_forward_prepared.1} parent=5 // pred_check_branch
        %525 = sbr.rel (%p523) target = $region89
      $region88: #{_forward_prepared.1} parent=5 // pred_region
        %s526 = ssub.s32 %s17, 2
        // Predicated region
        $region90: #{_forward_prepared.1} parent=88 // pred_check
          %p527 = pneg %p149
        $region91: #{_forward_prepared.1} parent=88 // pred_check_branch
          %529 = sbr.rel (%p527) target = $region93
        $region92: #{_forward_prepared.1} parent=88 // pred_region
          %s530 = sand.u32 %s134, 1
          %s531 = scalar_lea.sflag [#allocation7], %s530
          %s532 = sand.u32 %s134, 1
          %s533 = smul.addr %s532, 16
          %s534 = scalar_lea.vmem [#allocation8], %s533
          %535 = dma.done %s531, 256
        $region93: #{_forward_prepared.1} parent=88 // pred_fallthru
          _
      $region89: #{_forward_prepared.1} parent=5 // pred_fallthru
        _
    $region6: #{_forward_prepared.1} parent=1 // loop_footer
      %s21 = sadd.s32 1, %s17
    $region7: #{_forward_prepared.1} parent=1 // loop_footer_branch
      %16 = sbr.rel target = $region3
    $region8: #{_forward_prepared.1} parent=1 // loop_exit
      _
    %536 = vsyncpa [#allocation6], 1
    %s537 = scalar_lea.sflag [#allocation6], 1
    %538 = vsyncpa %s537, 1
    %539 = vsyncpa [#allocation7], 1
    %s540 = scalar_lea.sflag [#allocation7], 1
    %541 = vsyncpa %s540, 1

</llo_original>
